<compile_context>
chip_gen: v7x
topology: tpu7x:2x2x1
jax: 0.10.0
libtpu: 0.0.40
codegen_flags: <defaults>
</compile_context>

<pallas_src>
import math

import jax
import jax.numpy as jnp
from jax.experimental import pallas as pl
from jax.experimental.pallas import tpu as pltpu

_LANE = 128
_SUBLANE = 8


def _round_up(x, m):
    return (x + m - 1) // m * m


def _vmem_capacity_bytes():
    """Physical VMEM of the local TPU generation; conservative (v7x) fallback."""
    try:
        info = pltpu.get_tpu_info()
        for name in ("vmem_capacity_bytes", "vmem_size_bytes", "vmem_bytes"):
            cap = getattr(info, name, None)
            if cap:
                return int(cap)
    except Exception:
        pass
    return 64 * 1024 * 1024


def _vmem_budgets():
    """(per-z-tile budget, scoped vmem limit) for the local generation."""
    cap = _vmem_capacity_bytes()
    if cap >= 96 * 1024 * 1024:          # v5e / v6e: 128 MiB VMEM -> use it
        return 28 * 1024 * 1024, 96 * 1024 * 1024
    # v7x: 64 MiB VMEM per TensorCore
    return 10 * 1024 * 1024, min(48 * 1024 * 1024, cap * 3 // 4)


def _choose_node_tile(N, M, D, Qp, tile_budget):
    """Largest node tile whose padded per-step VMEM footprint fits the budget."""
    d_pad = _round_up(D, _LANE)
    m_pad = _round_up(M, _SUBLANE)
    per_node = (
        2 * m_pad * d_pad * 4        # (n_tile, M, D) z block (f32), double-buffered
        + 2 * d_pad * 4              # (n_tile, D) out block (f32), double-buffered
        + 2 * Qp * 4                 # two live (n_tile, Qp) f32 projection/tanh temps
        + d_pad * 2 + Qp * 2         # bf16 cast / MXU staging temps
        + _LANE * 4                  # (n_tile, M) score temp (lane-padded to 128)
    )
    cap = max(_SUBLANE, tile_budget // per_node)
    if N <= cap:
        return N                                           # block == full dim is always legal
    return max(_SUBLANE, (cap // _SUBLANE) * _SUBLANE)     # multiple of 8 for (8,128) tiling


def semantic_attention(z, weight, bias, q, *, return_scores=False):
    """z: (N, M, D); weight: (D, Q); bias: (1, Q); q: (Q, 1)  ->  (N, D) in z.dtype."""
    N, M, D = z.shape
    Dw, Q = weight.shape
    assert Dw == D, "weight must be (in_feature_dim, q_vector)"

    f32 = jnp.float32
    out_dtype = z.dtype
    zf = z.astype(f32)   # no-op for float32 inputs

    # Lane-pad the tiny projection params to a full 128-lane tile.  Zero padding is
    # exact: tanh(0 + 0) = 0 contributes nothing once multiplied by the zero-padded q.
    Qp = _round_up(Q, _LANE)
    w_p = jnp.pad(weight.astype(f32), ((0, 0), (0, Qp - Q))).astype(jnp.bfloat16)  # MXU operand
    b_p = jnp.pad(bias.astype(f32), ((0, 0), (0, Qp - Q)))
    q_p = jnp.pad(q.astype(f32).reshape(1, Q), ((0, 0), (0, Qp - Q)))

    tile_budget, vmem_limit = _vmem_budgets()
    n_tile = _choose_node_tile(N, M, D, Qp, tile_budget)
    grid_n = pl.cdiv(N, n_tile)

    def fused_kernel(z_ref, w_ref, b_ref, q_ref, o_ref, ssum_ref):
        i = pl.program_id(0)
        zb = z_ref[...]                                        # (n_tile, M, D) f32

        # ---- output tile.  beta == softmax over a size-1 axis == 1.0 exactly, so
        # (beta * z).sum(1) == z.sum(1): no dependence on the global score reduction.
        o_ref[...] = jnp.sum(zb, axis=1).astype(o_ref.dtype)

        # ---- per-semantic score partial sums (faithful to the module forward even
        # though beta is constant).  Mask rows of a partial final node tile only at the
        # score level; garbage rows never reach the accumulator or the stored output.
        node = jax.lax.broadcasted_iota(jnp.int32, (n_tile, 1), 0) + i * n_tile
        valid = node < N                                       # (n_tile, 1)

        wmat = w_ref[...]                                      # (D, Qp)  bf16
        brow = b_ref[...]                                      # (1, Qp)  f32
        qrow = q_ref[...]                                      # (1, Qp)  f32

        lane = jax.lax.broadcasted_iota(jnp.int32, (n_tile, M), 1)
        scores = jnp.zeros((n_tile, M), f32)
        for m in range(M):                                     # M = #meta-paths, small -> unroll
            z_m = zb[:, m, :].astype(jnp.bfloat16)             # (n_tile, D) static slice
            proj = jnp.dot(z_m, wmat, preferred_element_type=jnp.float32) + brow
            wh = jnp.tanh(proj)                                # (n_tile, Qp)  MXU + EUP
            s = jnp.sum(wh * qrow, axis=-1, keepdims=True)     # (n_tile, 1)   VPU lane reduce
            s = jnp.where(valid, s, 0.0)
            scores = jnp.where(lane == m, s, scores)           # place column m
        ssum_ref[...] = jnp.sum(scores, axis=0, keepdims=True).reshape(1, 1, M)

    out, partial = pl.pallas_call(
        fused_kernel,
        out_shape=(
            jax.ShapeDtypeStruct((N, D), out_dtype),
            jax.ShapeDtypeStruct((grid_n, 1, M), f32),         # per-tile partial score sums
        ),
        grid_spec=pltpu.PrefetchScalarGridSpec(
            num_scalar_prefetch=0,
            grid=(grid_n,),
            in_specs=[
                pl.BlockSpec((n_tile, M, D), lambda i: (i, 0, 0)),   # z tile (read ONCE)
                pl.BlockSpec((D, Qp), lambda i: (0, 0)),             # W  (constant block)
                pl.BlockSpec((1, Qp), lambda i: (0, 0)),             # b
                pl.BlockSpec((1, Qp), lambda i: (0, 0)),             # q
            ],
            out_specs=(
                pl.BlockSpec((n_tile, D), lambda i: (i, 0)),
                pl.BlockSpec((1, 1, M), lambda i: (i, 0, 0)),
            ),
        ),
        compiler_params=pltpu.CompilerParams(
            dimension_semantics=("parallel",),     # node tiles independent -> v7x megacore
            vmem_limit_bytes=vmem_limit,
        ),
    )(zf, w_p, b_p, q_p)

    # Tiny (M, 1) glue, faithful to the module: mean over nodes, softmax over dim=1
    # (a size-1 axis, so beta == 1.0 and it does not feed back into `out`).
    w_mean = (jnp.sum(partial, axis=0).reshape(M, 1)) / float(N)
    beta = jax.nn.softmax(w_mean, axis=1)  # noqa: F841  (kept for faithfulness; constant 1)

    if return_scores:
        return out, w_mean
    return out


def xavier_uniform(key, shape, gain):
    # torch.nn.init.xavier_uniform_ for 2-D tensors.
    fan_out, fan_in = shape
    bound = gain * math.sqrt(6.0 / (fan_in + fan_out))
    return jax.random.uniform(key, shape, jnp.float32, -bound, bound)


if __name__ == "__main__":
    # N nodes, M semantics (meta-paths), D = in_feature_dim, Q = q_vector
    N, M, D, Q = 8, 4, 32, 16
    key = jax.random.PRNGKey(0)
    kz, kw, kb, kq = jax.random.split(key, 4)

    z = jax.random.normal(kz, (N, M, D), jnp.float32)
    weight = xavier_uniform(kw, (D, Q), gain=1.667)
    bias = xavier_uniform(kb, (1, Q), gain=1.667)
    q_vec = xavier_uniform(kq, (Q, 1), gain=1.667)

    fwd = jax.jit(lambda a, b, c, d: semantic_attention(a, b, c, d, return_scores=True))
    out, w_mean = jax.block_until_ready(fwd(z, weight, bias, q_vec))

    # Pure-JAX reference reproducing the PyTorch forward exactly (f32 everywhere).
    Wh = jnp.tanh(jnp.matmul(z, weight) + bias)        # (N, M, Q)
    w = jnp.matmul(Wh, q_vec)                          # (N, M, 1)
    wm_ref = jnp.mean(w, axis=0)                       # (M, 1)
    beta = jax.nn.softmax(wm_ref, axis=1)              # softmax over size-1 axis -> all ones
    beta = jnp.broadcast_to(beta, (N,) + beta.shape)   # (N, M, 1)
    ref = jnp.sum(beta * z, axis=1)                    # (N, D)

    assert out.shape == (N, D), f"bad output shape {out.shape}"
    assert jnp.allclose(out, ref, atol=1e-5, rtol=1e-5), "kernel output mismatch vs reference"

    # Secondary check of the (output-dead) score path.  The kernel feeds the MXU bf16
    # operands with f32 accumulation, so compare against the same precision recipe.
    Wh16 = jnp.tanh(jnp.matmul(z.astype(jnp.bfloat16), weight.astype(jnp.bfloat16),
                               preferred_element_type=jnp.float32) + bias)
    wm16 = jnp.mean(jnp.matmul(Wh16, q_vec), axis=0)   # (M, 1)
    assert jnp.allclose(w_mean, wm16, atol=1e-2, rtol=1e-2), "score-path mismatch vs bf16 reference"

    print("KERNEL_OK")
</pallas_src>

<mosaic_0001>
module attributes {stable_mosaic.version = 11 : i64} {
  func.func @fused_kernel(%arg0: i32, %arg1: memref<8x4x32xf32, #tpu.memory_space<vmem>>, %arg2: memref<32x128xbf16, #tpu.memory_space<vmem>>, %arg3: memref<1x128xf32, #tpu.memory_space<vmem>>, %arg4: memref<1x128xf32, #tpu.memory_space<vmem>>, %arg5: memref<8x32xf32, #tpu.memory_space<vmem>>, %arg6: memref<1x1x4xf32, #tpu.memory_space<vmem>>) attributes {dimension_semantics = [#tpu.dimension_semantics<parallel>], iteration_bounds = array<i64: 1>, scalar_prefetch = 0 : i64, scratch_operands = 0 : i64, tpu.core_type = #tpu.core_type<tc>, window_params = [{transform_indices = @transform_0, window_bounds = array<i64: 8, 4, 32>}, {pipeline_mode = #tpu.pipeline_mode<synchronous>, transform_indices = @transform_1, window_bounds = array<i64: 32, 128>}, {pipeline_mode = #tpu.pipeline_mode<synchronous>, transform_indices = @transform_2, window_bounds = array<i64: 1, 128>}, {pipeline_mode = #tpu.pipeline_mode<synchronous>, transform_indices = @transform_3, window_bounds = array<i64: 1, 128>}, {transform_indices = @transform_4, window_bounds = array<i64: 8, 32>}, {transform_indices = @transform_5, window_bounds = array<i64: 1, 1, 4>}]} {
    %c0 = arith.constant 0 : index
    %c0_0 = arith.constant 0 : index
    %c0_1 = arith.constant 0 : index
    %0 = vector.load %arg1[%c0, %c0_0, %c0_1] : memref<8x4x32xf32, #tpu.memory_space<vmem>>, vector<8x4x32xf32>
    %cst = arith.constant dense<0.000000e+00> : vector<8x32xf32>
    %1 = vector.multi_reduction <add>, %0, %cst [1] : vector<8x4x32xf32> to vector<8x32xf32>
    %c0_2 = arith.constant 0 : index
    %c0_3 = arith.constant 0 : index
    %2 = vector.load %arg5[%c0_2, %c0_3] : memref<8x32xf32, #tpu.memory_space<vmem>>, vector<8x32xf32>
    tpu.vector_store %arg5[%c0_2, %c0_3], %1 {strides = array<i32>} : memref<8x32xf32, #tpu.memory_space<vmem>>, vector<8x32xf32>,
    %3 = tpu.iota {dimensions = array<i32: 0>} : vector<8x1xi32>
    %c8_i32 = arith.constant 8 : i32
    %4 = arith.muli %arg0, %c8_i32 : i32
    %5 = vector.broadcast %4 : i32 to vector<8x1xi32>
    %6 = arith.addi %3, %5 : vector<8x1xi32>
    %c8_i32_4 = arith.constant 8 : i32
    %7 = vector.broadcast %c8_i32_4 : i32 to vector<8x1xi32>
    %8 = arith.cmpi slt, %6, %7 : vector<8x1xi32>
    %c0_5 = arith.constant 0 : index
    %c0_6 = arith.constant 0 : index
    %9 = vector.load %arg2[%c0_5, %c0_6] : memref<32x128xbf16, #tpu.memory_space<vmem>>, vector<32x128xbf16>
    %c0_7 = arith.constant 0 : index
    %c0_8 = arith.constant 0 : index
    %10 = vector.load %arg3[%c0_7, %c0_8] : memref<1x128xf32, #tpu.memory_space<vmem>>, vector<1x128xf32>
    %c0_9 = arith.constant 0 : index
    %c0_10 = arith.constant 0 : index
    %11 = vector.load %arg4[%c0_9, %c0_10] : memref<1x128xf32, #tpu.memory_space<vmem>>, vector<1x128xf32>
    %12 = tpu.iota {dimensions = array<i32: 1>} : vector<8x4xi32>
    %cst_11 = arith.constant 0.000000e+00 : f32
    %13 = vector.broadcast %cst_11 : f32 to vector<8x4xf32>
    %14 = vector.extract_strided_slice %0 {offsets = [0, 0, 0], sizes = [8, 1, 32], strides = [1, 1, 1]} : vector<8x4x32xf32> to vector<8x1x32xf32>
    %15 = vector.shape_cast %14 : vector<8x1x32xf32> to vector<8x32xf32>
    %16 = arith.truncf %15 : vector<8x32xf32> to vector<8x32xbf16>
    %cst_12 = arith.constant dense<0.000000e+00> : vector<8x128xf32>
    %17 = tpu.matmul %16, %9, %cst_12 {dimension_numbers = #tpu.dot_dimension_numbers<[1], [0], [0], [1], [0, 0, 1, 1], [], []>} : vector<8x32xbf16>, vector<32x128xbf16>, vector<8x128xf32> -> vector<8x128xf32>
    %18 = vector.broadcast %10 : vector<1x128xf32> to vector<8x128xf32>
    %19 = arith.addf %17, %18 : vector<8x128xf32>
    %20 = math.tanh %19 : vector<8x128xf32>
    %21 = vector.broadcast %11 : vector<1x128xf32> to vector<8x128xf32>
    %22 = arith.mulf %20, %21 : vector<8x128xf32>
    %cst_13 = arith.constant dense<0.000000e+00> : vector<8xf32>
    %23 = vector.multi_reduction <add>, %22, %cst_13 [1] : vector<8x128xf32> to vector<8xf32>
    %24 = vector.shape_cast %23 : vector<8xf32> to vector<8x1xf32>
    %cst_14 = arith.constant 0.000000e+00 : f32
    %25 = vector.broadcast %cst_14 : f32 to vector<8x1xf32>
    %26 = arith.select %8, %24, %25 : vector<8x1xi1>, vector<8x1xf32>
    %c0_i32 = arith.constant 0 : i32
    %27 = vector.broadcast %c0_i32 : i32 to vector<8x4xi32>
    %28 = arith.cmpi eq, %12, %27 : vector<8x4xi32>
    %29 = vector.shape_cast %26 : vector<8x1xf32> to vector<8x1xf32>
    %30 = vector.broadcast %29 : vector<8x1xf32> to vector<8x4xf32>
    %31 = arith.select %28, %30, %13 : vector<8x4xi1>, vector<8x4xf32>
    %32 = vector.extract_strided_slice %0 {offsets = [0, 1, 0], sizes = [8, 1, 32], strides = [1, 1, 1]} : vector<8x4x32xf32> to vector<8x1x32xf32>
    %33 = vector.shape_cast %32 : vector<8x1x32xf32> to vector<8x32xf32>
    %34 = arith.truncf %33 : vector<8x32xf32> to vector<8x32xbf16>
    %cst_15 = arith.constant dense<0.000000e+00> : vector<8x128xf32>
    %35 = tpu.matmul %34, %9, %cst_15 {dimension_numbers = #tpu.dot_dimension_numbers<[1], [0], [0], [1], [0, 0, 1, 1], [], []>} : vector<8x32xbf16>, vector<32x128xbf16>, vector<8x128xf32> -> vector<8x128xf32>
    %36 = vector.broadcast %10 : vector<1x128xf32> to vector<8x128xf32>
    %37 = arith.addf %35, %36 : vector<8x128xf32>
    %38 = math.tanh %37 : vector<8x128xf32>
    %39 = vector.broadcast %11 : vector<1x128xf32> to vector<8x128xf32>
    %40 = arith.mulf %38, %39 : vector<8x128xf32>
    %cst_16 = arith.constant dense<0.000000e+00> : vector<8xf32>
    %41 = vector.multi_reduction <add>, %40, %cst_16 [1] : vector<8x128xf32> to vector<8xf32>
    %42 = vector.shape_cast %41 : vector<8xf32> to vector<8x1xf32>
    %cst_17 = arith.constant 0.000000e+00 : f32
    %43 = vector.broadcast %cst_17 : f32 to vector<8x1xf32>
    %44 = arith.select %8, %42, %43 : vector<8x1xi1>, vector<8x1xf32>
    %c1_i32 = arith.constant 1 : i32
    %45 = vector.broadcast %c1_i32 : i32 to vector<8x4xi32>
    %46 = arith.cmpi eq, %12, %45 : vector<8x4xi32>
    %47 = vector.shape_cast %44 : vector<8x1xf32> to vector<8x1xf32>
    %48 = vector.broadcast %47 : vector<8x1xf32> to vector<8x4xf32>
    %49 = arith.select %46, %48, %31 : vector<8x4xi1>, vector<8x4xf32>
    %50 = vector.extract_strided_slice %0 {offsets = [0, 2, 0], sizes = [8, 1, 32], strides = [1, 1, 1]} : vector<8x4x32xf32> to vector<8x1x32xf32>
    %51 = vector.shape_cast %50 : vector<8x1x32xf32> to vector<8x32xf32>
    %52 = arith.truncf %51 : vector<8x32xf32> to vector<8x32xbf16>
    %cst_18 = arith.constant dense<0.000000e+00> : vector<8x128xf32>
    %53 = tpu.matmul %52, %9, %cst_18 {dimension_numbers = #tpu.dot_dimension_numbers<[1], [0], [0], [1], [0, 0, 1, 1], [], []>} : vector<8x32xbf16>, vector<32x128xbf16>, vector<8x128xf32> -> vector<8x128xf32>
    %54 = vector.broadcast %10 : vector<1x128xf32> to vector<8x128xf32>
    %55 = arith.addf %53, %54 : vector<8x128xf32>
    %56 = math.tanh %55 : vector<8x128xf32>
    %57 = vector.broadcast %11 : vector<1x128xf32> to vector<8x128xf32>
    %58 = arith.mulf %56, %57 : vector<8x128xf32>
    %cst_19 = arith.constant dense<0.000000e+00> : vector<8xf32>
    %59 = vector.multi_reduction <add>, %58, %cst_19 [1] : vector<8x128xf32> to vector<8xf32>
    %60 = vector.shape_cast %59 : vector<8xf32> to vector<8x1xf32>
    %cst_20 = arith.constant 0.000000e+00 : f32
    %61 = vector.broadcast %cst_20 : f32 to vector<8x1xf32>
    %62 = arith.select %8, %60, %61 : vector<8x1xi1>, vector<8x1xf32>
    %c2_i32 = arith.constant 2 : i32
    %63 = vector.broadcast %c2_i32 : i32 to vector<8x4xi32>
    %64 = arith.cmpi eq, %12, %63 : vector<8x4xi32>
    %65 = vector.shape_cast %62 : vector<8x1xf32> to vector<8x1xf32>
    %66 = vector.broadcast %65 : vector<8x1xf32> to vector<8x4xf32>
    %67 = arith.select %64, %66, %49 : vector<8x4xi1>, vector<8x4xf32>
    %68 = vector.extract_strided_slice %0 {offsets = [0, 3, 0], sizes = [8, 1, 32], strides = [1, 1, 1]} : vector<8x4x32xf32> to vector<8x1x32xf32>
    %69 = vector.shape_cast %68 : vector<8x1x32xf32> to vector<8x32xf32>
    %70 = arith.truncf %69 : vector<8x32xf32> to vector<8x32xbf16>
    %cst_21 = arith.constant dense<0.000000e+00> : vector<8x128xf32>
    %71 = tpu.matmul %70, %9, %cst_21 {dimension_numbers = #tpu.dot_dimension_numbers<[1], [0], [0], [1], [0, 0, 1, 1], [], []>} : vector<8x32xbf16>, vector<32x128xbf16>, vector<8x128xf32> -> vector<8x128xf32>
    %72 = vector.broadcast %10 : vector<1x128xf32> to vector<8x128xf32>
    %73 = arith.addf %71, %72 : vector<8x128xf32>
    %74 = math.tanh %73 : vector<8x128xf32>
    %75 = vector.broadcast %11 : vector<1x128xf32> to vector<8x128xf32>
    %76 = arith.mulf %74, %75 : vector<8x128xf32>
    %cst_22 = arith.constant dense<0.000000e+00> : vector<8xf32>
    %77 = vector.multi_reduction <add>, %76, %cst_22 [1] : vector<8x128xf32> to vector<8xf32>
    %78 = vector.shape_cast %77 : vector<8xf32> to vector<8x1xf32>
    %cst_23 = arith.constant 0.000000e+00 : f32
    %79 = vector.broadcast %cst_23 : f32 to vector<8x1xf32>
    %80 = arith.select %8, %78, %79 : vector<8x1xi1>, vector<8x1xf32>
    %c3_i32 = arith.constant 3 : i32
    %81 = vector.broadcast %c3_i32 : i32 to vector<8x4xi32>
    %82 = arith.cmpi eq, %12, %81 : vector<8x4xi32>
    %83 = vector.shape_cast %80 : vector<8x1xf32> to vector<8x1xf32>
    %84 = vector.broadcast %83 : vector<8x1xf32> to vector<8x4xf32>
    %85 = arith.select %82, %84, %67 : vector<8x4xi1>, vector<8x4xf32>
    %cst_24 = arith.constant dense<0.000000e+00> : vector<4xf32>
    %86 = vector.multi_reduction <add>, %85, %cst_24 [0] : vector<8x4xf32> to vector<4xf32>
    %87 = vector.shape_cast %86 : vector<4xf32> to vector<1x4xf32>
    %88 = vector.shape_cast %87 : vector<1x4xf32> to vector<1x1x4xf32>
    %c0_25 = arith.constant 0 : index
    %c0_26 = arith.constant 0 : index
    %c0_27 = arith.constant 0 : index
    %89 = vector.load %arg6[%c0_25, %c0_26, %c0_27] : memref<1x1x4xf32, #tpu.memory_space<vmem>>, vector<1x1x4xf32>
    tpu.vector_store %arg6[%c0_25, %c0_26, %c0_27], %88 {strides = array<i32>} : memref<1x1x4xf32, #tpu.memory_space<vmem>>, vector<1x1x4xf32>,
    return
  }
  func.func @transform_0(%arg0: i32) -> (i32, i32, i32) {
    %c0_i32 = arith.constant 0 : i32
    %c0_i32_0 = arith.constant 0 : i32
    %c0_i32_1 = arith.constant 0 : i32
    return %arg0, %c0_i32, %c0_i32_0 : i32, i32, i32
  }
  func.func @transform_1(%arg0: i32) -> (i32, i32) {
    %c0_i32 = arith.constant 0 : i32
    %c0_i32_0 = arith.constant 0 : i32
    %c0_i32_1 = arith.constant 0 : i32
    return %c0_i32, %c0_i32_0 : i32, i32
  }
  func.func @transform_2(%arg0: i32) -> (i32, i32) {
    %c0_i32 = arith.constant 0 : i32
    %c0_i32_0 = arith.constant 0 : i32
    %c0_i32_1 = arith.constant 0 : i32
    return %c0_i32, %c0_i32_0 : i32, i32
  }
  func.func @transform_3(%arg0: i32) -> (i32, i32) {
    %c0_i32 = arith.constant 0 : i32
    %c0_i32_0 = arith.constant 0 : i32
    %c0_i32_1 = arith.constant 0 : i32
    return %c0_i32, %c0_i32_0 : i32, i32
  }
  func.func @transform_4(%arg0: i32) -> (i32, i32) {
    %c0_i32 = arith.constant 0 : i32
    %c0_i32_0 = arith.constant 0 : i32
    return %arg0, %c0_i32 : i32, i32
  }
  func.func @transform_5(%arg0: i32) -> (i32, i32, i32) {
    %c0_i32 = arith.constant 0 : i32
    %c0_i32_0 = arith.constant 0 : i32
    %c0_i32_1 = arith.constant 0 : i32
    return %arg0, %c0_i32, %c0_i32_0 : i32, i32, i32
  }
}

</mosaic_0001>

<llo_original>
// kernel: _lambda_.1
$region0: #{_lambda_.1}
  #allocation0 [shape = 'u32[]', space=smem, size = 0x4, offset = 0x4, fixed_abs, tag = 'smem constant byte address 0x4 - core index']
  #allocation1 [shape = 'u32[144,128]{1,0:T(1,128)}', space=vmem, size = 0x12000, scoped, tag = 'internal scratch']
  %s0 = inlined_call_operand.vmem [shape: f32[8,4,32], index: 0, kind: input, shape index: {}]
  %s1 = inlined_call_operand.vmem [shape: bf16[32,128], index: 1, kind: input, shape index: {}]
  %s2 = inlined_call_operand.vmem [shape: f32[1,128], index: 2, kind: input, shape index: {}]
  %s3 = inlined_call_operand.vmem [shape: f32[1,128], index: 3, kind: input, shape index: {}]
  %s4 = inlined_call_operand.hbm [shape: f32[8,32], index: 4, kind: output, shape index: {0}]
  %s5 = inlined_call_operand.vmem [shape: f32[1,1,4], index: 5, kind: output, shape index: {1}]
  %6 = xla_tuple %s4, %s5
  %s7 = sld [smem:[#allocation0]]
  $region34: #{_lambda_.1} parent=0
    _
  %s9 = ssub.s32 1, %s7
  %s10 = scalar_select 0, %s9, %s7
  $region1: #{_lambda_.1} parent=0
    #allocation2 [shape = 'u8[4096]{0}', space=vmem, size = 0x1000, scoped, tag = 'output window, operand 0, single buffered']
    #allocation3 [shape = 's32[1]{0}', space=sflag, size = 0x4, scoped, tag = 'scoped memory for _lambda_.1']
    %11 = vsyncpa [#allocation3], 0
    // Predicated region
    $region2: #{_lambda_.1} parent=1 // pred_check
      _
    $region3: #{_lambda_.1} parent=1 // pred_check_branch
      %13 = sbr.rel (0) target = $region5
    $region4: #{_lambda_.1} parent=1 // pred_region
      _
    $region5: #{_lambda_.1} parent=1 // pred_fallthru
      _
    // Predicated region
    $region6: #{_lambda_.1} parent=1 // pred_check
      _
    $region7: #{_lambda_.1} parent=1 // pred_check_branch
      %15 = sbr.rel (0) target = $region9
    $region8: #{_lambda_.1} parent=1 // pred_region
      _
    $region9: #{_lambda_.1} parent=1 // pred_fallthru
      _
    // Predicated region
    $region10: #{_lambda_.1} parent=1 // pred_check
      _
    $region11: #{_lambda_.1} parent=1 // pred_check_branch
      %17 = sbr.rel (0) target = $region13
    $region12: #{_lambda_.1} parent=1 // pred_region
      _
    $region13: #{_lambda_.1} parent=1 // pred_fallthru
      _
    // Predicated region
    $region14: #{_lambda_.1} parent=1 // pred_check
      _
    $region15: #{_lambda_.1} parent=1 // pred_check_branch
      %19 = sbr.rel (0) target = $region17
    $region16: #{_lambda_.1} parent=1 // pred_region
      _
    $region17: #{_lambda_.1} parent=1 // pred_fallthru
      _
    %v21 = vld [vmem:[%s0] sm:$0xf]
    %v22 = vld [vmem:[%s0 + $0x4] sm:$0xf]
    %v23 = vld [vmem:[%s0 + $0x8] sm:$0xf]
    %v24 = vld [vmem:[%s0 + $0xc] sm:$0xf]
    %v25 = vld [vmem:[%s0 + $0x10] sm:$0xf]
    %v26 = vld [vmem:[%s0 + $0x14] sm:$0xf]
    %v27 = vld [vmem:[%s0 + $0x18] sm:$0xf]
    %v28 = vld [vmem:[%s0 + $0x1c] sm:$0xf]
    %vm29 = vcmask 257024
    %v30 = vsel %vm29, %v21, 0.0
    %v31 = vrot.slane %v30, 4
    %v32 = vadd.f32 %v30, %v31
    %v33 = vrot.slane %v32, 2
    %v34 = vadd.f32 %v32, %v33
    %v35 = vrot.slane %v34, 1
    %v36 = vadd.f32 %v34, %v35
    %v37 = vsel %vm29, %v22, 0.0
    %v38 = vrot.slane %v37, 4
    %v39 = vadd.f32 %v37, %v38
    %v40 = vrot.slane %v39, 2
    %v41 = vadd.f32 %v39, %v40
    %v42 = vrot.slane %v41, 1
    %v43 = vadd.f32 %v41, %v42
    %v44 = vsel %vm29, %v23, 0.0
    %v45 = vrot.slane %v44, 4
    %v46 = vadd.f32 %v44, %v45
    %v47 = vrot.slane %v46, 2
    %v48 = vadd.f32 %v46, %v47
    %v49 = vrot.slane %v48, 1
    %v50 = vadd.f32 %v48, %v49
    %v51 = vsel %vm29, %v24, 0.0
    %v52 = vrot.slane %v51, 4
    %v53 = vadd.f32 %v51, %v52
    %v54 = vrot.slane %v53, 2
    %v55 = vadd.f32 %v53, %v54
    %v56 = vrot.slane %v55, 1
    %v57 = vadd.f32 %v55, %v56
    %v58 = vsel %vm29, %v25, 0.0
    %v59 = vrot.slane %v58, 4
    %v60 = vadd.f32 %v58, %v59
    %v61 = vrot.slane %v60, 2
    %v62 = vadd.f32 %v60, %v61
    %v63 = vrot.slane %v62, 1
    %v64 = vadd.f32 %v62, %v63
    %v65 = vsel %vm29, %v26, 0.0
    %v66 = vrot.slane %v65, 4
    %v67 = vadd.f32 %v65, %v66
    %v68 = vrot.slane %v67, 2
    %v69 = vadd.f32 %v67, %v68
    %v70 = vrot.slane %v69, 1
    %v71 = vadd.f32 %v69, %v70
    %v72 = vsel %vm29, %v27, 0.0
    %v73 = vrot.slane %v72, 4
    %v74 = vadd.f32 %v72, %v73
    %v75 = vrot.slane %v74, 2
    %v76 = vadd.f32 %v74, %v75
    %v77 = vrot.slane %v76, 1
    %v78 = vadd.f32 %v76, %v77
    %v79 = vsel %vm29, %v28, 0.0
    %v80 = vrot.slane %v79, 4
    %v81 = vadd.f32 %v79, %v80
    %v82 = vrot.slane %v81, 2
    %v83 = vadd.f32 %v81, %v82
    %v84 = vrot.slane %v83, 1
    %v85 = vadd.f32 %v83, %v84
    %vm94 = vcmask 1041409
    %v95 = vsel %vm94, %v43, %v36
    %vm96 = vcmask 1042434
    %v97 = vsel %vm96, %v50, %v95
    %vm98 = vcmask 1043459
    %v99 = vsel %vm98, %v57, %v97
    %vm100 = vcmask 1044484
    %v101 = vsel %vm100, %v64, %v99
    %vm102 = vcmask 1045509
    %v103 = vsel %vm102, %v71, %v101
    %vm104 = vcmask 1046534
    %v105 = vsel %vm104, %v78, %v103
    %vm106 = vcmask 1047559
    %v107 = vsel %vm106, %v85, %v105
    %vm109 = vcmask 261120
    %110 = vst.msk [vmem:[#allocation2] sm:$0xff] %vm109, %v107
    %v111 = vlaneseq
    %v112 = vshrl.u32 %v111, 7
    %s113 = smul.u32 0, 8
    %v114 = vstv %s113
    %v115 = vadd.s32 %v112, %v114
    %vm116 = vcmp.lt.s32.totalorder %v115, 8
    %v117 = vld [vmem:[%s1] sm:$0xf]
    %v118 = vld [vmem:[%s1 + $0x4] sm:$0xf]
    %v119 = vld [vmem:[%s1 + $0x8] sm:$0xf]
    %v120 = vld [vmem:[%s1 + $0xc] sm:$0xf]
    %v121 = vld [vmem:[%s2] sm:$0x1]
    %v122 = vld [vmem:[%s3] sm:$0x1]
    %v123 = vlaneseq
    %v124 = vand.u32 %v123, 127
    %v125 = vpack.c.bf16 %v21, %v21
    %v126 = vpack.c.bf16 %v22, %v22
    %v127 = vpack.c.bf16 %v23, %v23
    %v128 = vpack.c.bf16 %v24, %v24
    %v129 = vpack.c.bf16 %v25, %v25
    %v130 = vpack.c.bf16 %v26, %v26
    %v131 = vpack.c.bf16 %v27, %v27
    %v132 = vpack.c.bf16 %v28, %v28
    %v134 = vlaneseq
    %v135 = vshrl.u32 %v134, 7
    %v136 = vsub.s32 0, %v135
    %v137 = vrot.slane %v121, %v136
    %v147 = vunpack.c.l.b16 %v125
    %v148 = vunpack.c.l.b16 %v126
    %v149 = vunpack.c.l.b16 %v127
    %v150 = vunpack.c.l.b16 %v128
    %v151 = vunpack.c.l.b16 %v129
    %v152 = vunpack.c.l.b16 %v130
    %v153 = vunpack.c.l.b16 %v131
    %v154 = vunpack.c.l.b16 %v132
    %v155 = vrot.slane %v148, 7
    %v156 = vsel %vm94, %v155, %v147
    %v157 = vrot.slane %v149, 6
    %v158 = vsel %vm96, %v157, %v156
    %v159 = vrot.slane %v150, 5
    %v160 = vsel %vm98, %v159, %v158
    %v161 = vrot.slane %v151, 4
    %v162 = vsel %vm100, %v161, %v160
    %v163 = vrot.slane %v152, 3
    %v164 = vsel %vm102, %v163, %v162
    %v165 = vrot.slane %v153, 2
    %v166 = vsel %vm104, %v165, %v164
    %v167 = vrot.slane %v154, 1
    %v168 = vsel %vm106, %v167, %v166
    %v169 = vpack.c.b16 %v168, %v168
    %v174 = vunpack.c.l.b16 %v117
    %v175 = vunpack.c.l.b16 %v118
    %v176 = vunpack.c.l.b16 %v119
    %v177 = vunpack.c.l.b16 %v120
    %v178 = vpack.c.b16 %v175, %v174
    %v179 = vpack.c.b16 %v177, %v176
    %v183 = vsel %vm109, %v169, 0
    %185 = vmatprep.subr.bf16.mxu0 0
    %186 = vmatpush1.bf16.msra.mxu0 %v178
    %187 = vmatprep.subr.bf16.mxu0 0
    %188 = vmatpush1.bf16.msra.mxu0 %v179
    %189 = vmatprep.subr.bf16.mxu0 0
    %190 = vmatpush1.bf16.msra.mxu0 0
    %191 = vmatprep.subr.bf16.mxu0 0
    %192 = vmatpush1.bf16.msra.mxu0 0
    %193 = vmatprep.subr.bf16.mxu0 0
    %194 = vmatpush1.bf16.msra.mxu0 0
    %195 = vmatprep.subr.bf16.mxu0 0
    %196 = vmatpush1.bf16.msra.mxu0 0
    %197 = vmatprep.subr.bf16.mxu0 0
    %198 = vmatpush1.bf16.msra.mxu0 0
    %199 = vmatprep.subr.bf16.mxu0 0
    %200 = vmatpush1.bf16.msra.mxu0 0
    %201 = vmatprep.subr.bf16.mxu0 0
    %202 = vmatpush1.bf16.msra.mxu0 0
    %203 = vmatprep.subr.bf16.mxu0 0
    %204 = vmatpush1.bf16.msra.mxu0 0
    %205 = vmatprep.subr.bf16.mxu0 0
    %206 = vmatpush1.bf16.msra.mxu0 0
    %207 = vmatprep.subr.bf16.mxu0 0
    %208 = vmatpush1.bf16.msra.mxu0 0
    %209 = vmatprep.subr.bf16.mxu0 0
    %210 = vmatpush1.bf16.msra.mxu0 0
    %211 = vmatprep.subr.bf16.mxu0 0
    %212 = vmatpush1.bf16.msra.mxu0 0
    %213 = vmatprep.subr.bf16.mxu0 0
    %214 = vmatpush1.bf16.msra.mxu0 0
    %215 = vmatprep.subr.bf16.mxu0 0
    %216 = vmatpush1.bf16.msra.mxu0 0
    %217 = vmatprep.mubr.bf16.mxu0 0
    %218 = vmatmul.mubr.bf16.gmra.mrb[0].mxu0 %v183
    %v219 = vpop.f32.mrb[0].mxu0
    %v220 = vadd.f32 %v137, %v219
    %v221 = vpop.f32.mrb[0].mxu0
    %v222 = vpop.f32.mrb[0].mxu0
    %v223 = vpop.f32.mrb[0].mxu0
    %224 = vdwg.mxu0
    %v225 = vtanh.pop %v220
    %v227 = vlaneseq
    %v228 = vshrl.u32 %v227, 7
    %v229 = vsub.s32 0, %v228
    %v230 = vrot.slane %v122, %v229
    %v232 = vmul.f32 %v225, %v230
    %233 = vadd.xlane.f32.xlu0 %v232
    %v234 = vpop.xlane.xlu0 %233
    %v235 = vsel %vm116, %v234, 0.0
    %vm236 = vcmp.eq.s32.totalorder %v124, 0
    %v237 = vsel %vm236, %v235, 0.0
    %v238 = vrot.slane %v147, 1
    %v239 = vsel %vm94, %v148, %v238
    %v240 = vrot.slane %v149, 7
    %v241 = vsel %vm96, %v240, %v239
    %v242 = vrot.slane %v150, 6
    %v243 = vsel %vm98, %v242, %v241
    %v244 = vrot.slane %v151, 5
    %v245 = vsel %vm100, %v244, %v243
    %v246 = vrot.slane %v152, 4
    %v247 = vsel %vm102, %v246, %v245
    %v248 = vrot.slane %v153, 3
    %v249 = vsel %vm104, %v248, %v247
    %v250 = vrot.slane %v154, 2
    %v251 = vsel %vm106, %v250, %v249
    %v252 = vpack.c.b16 %v251, %v251
    %v254 = vsel %vm109, %v252, 0
    %256 = vmatprep.subr.bf16.mxu0 0
    %257 = vmatpush1.bf16.msra.mxu0 %v178
    %258 = vmatprep.subr.bf16.mxu0 0
    %259 = vmatpush1.bf16.msra.mxu0 %v179
    %260 = vmatprep.subr.bf16.mxu0 0
    %261 = vmatpush1.bf16.msra.mxu0 0
    %262 = vmatprep.subr.bf16.mxu0 0
    %263 = vmatpush1.bf16.msra.mxu0 0
    %264 = vmatprep.subr.bf16.mxu0 0
    %265 = vmatpush1.bf16.msra.mxu0 0
    %266 = vmatprep.subr.bf16.mxu0 0
    %267 = vmatpush1.bf16.msra.mxu0 0
    %268 = vmatprep.subr.bf16.mxu0 0
    %269 = vmatpush1.bf16.msra.mxu0 0
    %270 = vmatprep.subr.bf16.mxu0 0
    %271 = vmatpush1.bf16.msra.mxu0 0
    %272 = vmatprep.subr.bf16.mxu0 0
    %273 = vmatpush1.bf16.msra.mxu0 0
    %274 = vmatprep.subr.bf16.mxu0 0
    %275 = vmatpush1.bf16.msra.mxu0 0
    %276 = vmatprep.subr.bf16.mxu0 0
    %277 = vmatpush1.bf16.msra.mxu0 0
    %278 = vmatprep.subr.bf16.mxu0 0
    %279 = vmatpush1.bf16.msra.mxu0 0
    %280 = vmatprep.subr.bf16.mxu0 0
    %281 = vmatpush1.bf16.msra.mxu0 0
    %282 = vmatprep.subr.bf16.mxu0 0
    %283 = vmatpush1.bf16.msra.mxu0 0
    %284 = vmatprep.subr.bf16.mxu0 0
    %285 = vmatpush1.bf16.msra.mxu0 0
    %286 = vmatprep.subr.bf16.mxu0 0
    %287 = vmatpush1.bf16.msra.mxu0 0
    %288 = vmatprep.mubr.bf16.mxu0 0
    %289 = vmatmul.mubr.bf16.gmra.mrb[0].mxu0 %v254
    %v290 = vpop.f32.mrb[0].mxu0
    %v291 = vadd.f32 %v137, %v290
    %v292 = vpop.f32.mrb[0].mxu0
    %v293 = vpop.f32.mrb[0].mxu0
    %v294 = vpop.f32.mrb[0].mxu0
    %295 = vdwg.mxu0
    %v296 = vtanh.pop %v291
    %v297 = vmul.f32 %v296, %v230
    %298 = vadd.xlane.f32.xlu0 %v297
    %v299 = vpop.xlane.xlu0 %298
    %v300 = vsel %vm116, %v299, 0.0
    %vm301 = vcmp.eq.s32.totalorder %v124, 1
    %v302 = vsel %vm301, %v300, %v237
    %v303 = vrot.slane %v147, 2
    %v304 = vrot.slane %v148, 1
    %v305 = vsel %vm94, %v304, %v303
    %v306 = vsel %vm96, %v149, %v305
    %v307 = vrot.slane %v150, 7
    %v308 = vsel %vm98, %v307, %v306
    %v309 = vrot.slane %v151, 6
    %v310 = vsel %vm100, %v309, %v308
    %v311 = vrot.slane %v152, 5
    %v312 = vsel %vm102, %v311, %v310
    %v313 = vrot.slane %v153, 4
    %v314 = vsel %vm104, %v313, %v312
    %v315 = vrot.slane %v154, 3
    %v316 = vsel %vm106, %v315, %v314
    %v317 = vpack.c.b16 %v316, %v316
    %v319 = vsel %vm109, %v317, 0
    %321 = vmatprep.subr.bf16.mxu0 0
    %322 = vmatpush1.bf16.msra.mxu0 %v178
    %323 = vmatprep.subr.bf16.mxu0 0
    %324 = vmatpush1.bf16.msra.mxu0 %v179
    %325 = vmatprep.subr.bf16.mxu0 0
    %326 = vmatpush1.bf16.msra.mxu0 0
    %327 = vmatprep.subr.bf16.mxu0 0
    %328 = vmatpush1.bf16.msra.mxu0 0
    %329 = vmatprep.subr.bf16.mxu0 0
    %330 = vmatpush1.bf16.msra.mxu0 0
    %331 = vmatprep.subr.bf16.mxu0 0
    %332 = vmatpush1.bf16.msra.mxu0 0
    %333 = vmatprep.subr.bf16.mxu0 0
    %334 = vmatpush1.bf16.msra.mxu0 0
    %335 = vmatprep.subr.bf16.mxu0 0
    %336 = vmatpush1.bf16.msra.mxu0 0
    %337 = vmatprep.subr.bf16.mxu0 0
    %338 = vmatpush1.bf16.msra.mxu0 0
    %339 = vmatprep.subr.bf16.mxu0 0
    %340 = vmatpush1.bf16.msra.mxu0 0
    %341 = vmatprep.subr.bf16.mxu0 0
    %342 = vmatpush1.bf16.msra.mxu0 0
    %343 = vmatprep.subr.bf16.mxu0 0
    %344 = vmatpush1.bf16.msra.mxu0 0
    %345 = vmatprep.subr.bf16.mxu0 0
    %346 = vmatpush1.bf16.msra.mxu0 0
    %347 = vmatprep.subr.bf16.mxu0 0
    %348 = vmatpush1.bf16.msra.mxu0 0
    %349 = vmatprep.subr.bf16.mxu0 0
    %350 = vmatpush1.bf16.msra.mxu0 0
    %351 = vmatprep.subr.bf16.mxu0 0
    %352 = vmatpush1.bf16.msra.mxu0 0
    %353 = vmatprep.mubr.bf16.mxu0 0
    %354 = vmatmul.mubr.bf16.gmra.mrb[0].mxu0 %v319
    %v355 = vpop.f32.mrb[0].mxu0
    %v356 = vadd.f32 %v137, %v355
    %v357 = vpop.f32.mrb[0].mxu0
    %v358 = vpop.f32.mrb[0].mxu0
    %v359 = vpop.f32.mrb[0].mxu0
    %360 = vdwg.mxu0
    %v361 = vtanh.pop %v356
    %v362 = vmul.f32 %v361, %v230
    %363 = vadd.xlane.f32.xlu0 %v362
    %v364 = vpop.xlane.xlu0 %363
    %v365 = vsel %vm116, %v364, 0.0
    %vm366 = vcmp.eq.s32.totalorder %v124, 2
    %v367 = vsel %vm366, %v365, %v302
    %v368 = vrot.slane %v147, 3
    %v369 = vrot.slane %v148, 2
    %v370 = vsel %vm94, %v369, %v368
    %v371 = vrot.slane %v149, 1
    %v372 = vsel %vm96, %v371, %v370
    %v373 = vsel %vm98, %v150, %v372
    %v374 = vrot.slane %v151, 7
    %v375 = vsel %vm100, %v374, %v373
    %v376 = vrot.slane %v152, 6
    %v377 = vsel %vm102, %v376, %v375
    %v378 = vrot.slane %v153, 5
    %v379 = vsel %vm104, %v378, %v377
    %v380 = vrot.slane %v154, 4
    %v381 = vsel %vm106, %v380, %v379
    %v382 = vpack.c.b16 %v381, %v381
    %v384 = vsel %vm109, %v382, 0
    %386 = vmatprep.subr.bf16.mxu0 0
    %387 = vmatpush1.bf16.msra.mxu0 %v178
    %388 = vmatprep.subr.bf16.mxu0 0
    %389 = vmatpush1.bf16.msra.mxu0 %v179
    %390 = vmatprep.subr.bf16.mxu0 0
    %391 = vmatpush1.bf16.msra.mxu0 0
    %392 = vmatprep.subr.bf16.mxu0 0
    %393 = vmatpush1.bf16.msra.mxu0 0
    %394 = vmatprep.subr.bf16.mxu0 0
    %395 = vmatpush1.bf16.msra.mxu0 0
    %396 = vmatprep.subr.bf16.mxu0 0
    %397 = vmatpush1.bf16.msra.mxu0 0
    %398 = vmatprep.subr.bf16.mxu0 0
    %399 = vmatpush1.bf16.msra.mxu0 0
    %400 = vmatprep.subr.bf16.mxu0 0
    %401 = vmatpush1.bf16.msra.mxu0 0
    %402 = vmatprep.subr.bf16.mxu0 0
    %403 = vmatpush1.bf16.msra.mxu0 0
    %404 = vmatprep.subr.bf16.mxu0 0
    %405 = vmatpush1.bf16.msra.mxu0 0
    %406 = vmatprep.subr.bf16.mxu0 0
    %407 = vmatpush1.bf16.msra.mxu0 0
    %408 = vmatprep.subr.bf16.mxu0 0
    %409 = vmatpush1.bf16.msra.mxu0 0
    %410 = vmatprep.subr.bf16.mxu0 0
    %411 = vmatpush1.bf16.msra.mxu0 0
    %412 = vmatprep.subr.bf16.mxu0 0
    %413 = vmatpush1.bf16.msra.mxu0 0
    %414 = vmatprep.subr.bf16.mxu0 0
    %415 = vmatpush1.bf16.msra.mxu0 0
    %416 = vmatprep.subr.bf16.mxu0 0
    %417 = vmatpush1.bf16.msra.mxu0 0
    %418 = vmatprep.mubr.bf16.mxu0 0
    %419 = vmatmul.mubr.bf16.gmra.mrb[0].mxu0 %v384
    %v420 = vpop.f32.mrb[0].mxu0
    %v421 = vadd.f32 %v137, %v420
    %v422 = vpop.f32.mrb[0].mxu0
    %v423 = vpop.f32.mrb[0].mxu0
    %v424 = vpop.f32.mrb[0].mxu0
    %425 = vdwg.mxu0
    %v426 = vtanh.pop %v421
    %v427 = vmul.f32 %v426, %v230
    %428 = vadd.xlane.f32.xlu0 %v427
    %v429 = vpop.xlane.xlu0 %428
    %v430 = vsel %vm116, %v429, 0.0
    %vm431 = vcmp.eq.s32.totalorder %v124, 3
    %v432 = vsel %vm431, %v430, %v367
    %vm433 = vcmask 31744
    %v434 = vsel %vm433, %v432, 0.0
    %v435 = vrot.slane %v434, 4
    %v436 = vadd.f32 %v434, %v435
    %v437 = vrot.slane %v436, 2
    %v438 = vadd.f32 %v436, %v437
    %v439 = vrot.slane %v438, 1
    %v440 = vadd.f32 %v438, %v439
    %vm441 = vcmask 24576
    %442 = vst.msk [vmem:[%s5] sm:$0x1] %vm441, %v440
    // Predicated region
    $region18: #{_lambda_.1} parent=1 // pred_check
      _
    $region19: #{_lambda_.1} parent=1 // pred_check_branch
      %444 = sbr.rel (0) target = $region21
    $region20: #{_lambda_.1} parent=1 // pred_region
      %s446 = ssub.s32 128, 128
      %447 = vsyncadd [#allocation3], %s446
      %s449 = sshll.u32 [#allocation2], 4
      %s450 = int_to_ptr.vmem [resolvable:$true] %s449
      %452 = dma.vmem_to_hbm [thread:$0]  %s450, 128, %s4, [#allocation3]
    $region21: #{_lambda_.1} parent=1 // pred_fallthru
      _
    // Predicated region
    $region22: #{_lambda_.1} parent=1 // pred_check
      _
    $region23: #{_lambda_.1} parent=1 // pred_check_branch
      %454 = sbr.rel (0) target = $region25
    $region24: #{_lambda_.1} parent=1 // pred_region
      _
    $region25: #{_lambda_.1} parent=1 // pred_fallthru
      _
    // Predicated region
    $region26: #{_lambda_.1} parent=1 // pred_check
      _
    $region27: #{_lambda_.1} parent=1 // pred_check_branch
      %456 = sbr.rel (0) target = $region29
    $region28: #{_lambda_.1} parent=1 // pred_region
      %457 = dma.done [#allocation3], 128
    $region29: #{_lambda_.1} parent=1 // pred_fallthru
      _
    // Predicated region
    $region30: #{_lambda_.1} parent=1 // pred_check
      _
    $region31: #{_lambda_.1} parent=1 // pred_check_branch
      %459 = sbr.rel (0) target = $region33
    $region32: #{_lambda_.1} parent=1 // pred_region
      _
    $region33: #{_lambda_.1} parent=1 // pred_fallthru
      _
    %460 = vsyncpa [#allocation3], 1

</llo_original>
